<compile_context>
chip_gen: v6e
topology: v6e:2x2x1
jax: 0.10.0
libtpu: 0.0.40
codegen_flags: <defaults>
</compile_context>

<pallas_src>
import functools
import math

import jax
import jax.numpy as jnp
from jax.experimental import pallas as pl
from jax.experimental.pallas import tpu as pltpu


def _round_up(x, n):
    return ((x + n - 1) // n) * n


def _pick_tile(dim, max_tile, align, pref_align=None):
    """Pick a tile size <= max_tile, aligned, preferring exact divisors of dim."""
    if dim <= max_tile:
        return _round_up(dim, align)
    pref = pref_align or align
    for a in (pref, align):
        start = max_tile - (max_tile % a)
        for t in range(start, a - 1, -a):
            if dim % t == 0:
                return t
    return max_tile


# -----------------------------------------------------------------------------
# Kernels
# -----------------------------------------------------------------------------
def _matmul_bias_kernel(x_ref, w_ref, b_ref, o_ref, acc_ref):
    # x_ref: (tm, tk) bf16, w_ref: (tk, tn) bf16, b_ref: (1, tn) f32,
    # o_ref: (tm, tn) out dtype, acc_ref: (tm, tn) f32 scratch.
    k = pl.program_id(2)

    @pl.when(k == 0)
    def _():
        acc_ref[...] = jnp.zeros_like(acc_ref)

    acc_ref[...] += jnp.dot(
        x_ref[...], w_ref[...], preferred_element_type=jnp.float32
    )

    @pl.when(k == pl.num_programs(2) - 1)
    def _():
        o_ref[...] = (acc_ref[...] + b_ref[...]).astype(o_ref.dtype)


def _matmul_bias_kernel_single_k(x_ref, w_ref, b_ref, o_ref):
    # Whole reduction fits in one tile: no accumulator round trip, no branches.
    o_ref[...] = (
        jnp.dot(x_ref[...], w_ref[...], preferred_element_type=jnp.float32)
        + b_ref[...]
    ).astype(o_ref.dtype)


# -----------------------------------------------------------------------------
# Parameter prep (run ONCE; hoisted out of the per-call hot path)
# -----------------------------------------------------------------------------
def prepare_sparse_linear(weight, bias, *, tn=None, tk=None):
    """Pre-transpose / pad / bf16-cast the (already masked) weight and pad bias.

    weight: (out_dim, in_dim), bias: (out_dim,).
    Returns (wT_p, b_p, n_out, tn, tk) where wT_p is (Kp, Np) bf16 and
    b_p is (1, Np) f32.
    """
    N, K = weight.shape
    if tn is None:
        tn = _pick_tile(N, 512, 128, pref_align=256)
    if tk is None:
        tk = _pick_tile(K, 1024, 128, pref_align=512)
    Np = _round_up(N, tn)
    Kp = _round_up(K, tk)

    wT = weight.T.astype(jnp.bfloat16)
    if (Kp, Np) != (K, N):
        wT_p = jnp.zeros((Kp, Np), jnp.bfloat16).at[:K, :N].set(wT)
    else:
        wT_p = wT

    b = bias.astype(jnp.float32)
    if Np != N:
        b_p = jnp.zeros((1, Np), jnp.float32).at[0, :N].set(b)
    else:
        b_p = b.reshape(1, Np)

    return wT_p, b_p, N, tn, tk


# -----------------------------------------------------------------------------
# Hot-path apply: only x is padded/cast per call.
# -----------------------------------------------------------------------------
@functools.partial(
    jax.jit, static_argnames=("n_out", "tn", "tk", "tm", "out_dtype")
)
def sparse_linear_apply(x, wT_p, b_p, *, n_out, tn, tk, tm=None, out_dtype=None):
    """y = x @ W.T + b using the pre-prepared (Kp, Np) bf16 weight."""
    B, K = x.shape
    Kp, Np = wT_p.shape
    assert K <= Kp and n_out <= Np
    odt = jnp.dtype(out_dtype) if out_dtype is not None else x.dtype

    if tm is None:
        tm = _pick_tile(B, 512, 16)
    Mp = _round_up(B, tm)

    # Pad/cast x only when needed (bf16 cast is required for the MXU path).
    x_bf = x.astype(jnp.bfloat16)
    if Mp != B or Kp != K:
        x_p = jnp.zeros((Mp, Kp), jnp.bfloat16).at[:B, :K].set(x_bf)
    else:
        x_p = x_bf

    gm, gn, gk = Mp // tm, Np // tn, Kp // tk

    # Double-buffered-input VMEM budget; cap the limit at 48 MiB so the same
    # config is safe on v7x (64 MiB physical) and above v5e's 16 MiB default.
    out_bytes = odt.itemsize
    vmem_need = (
        2 * (tm * tk) * 2          # x tiles (bf16, double-buffered)
        + 2 * (tk * tn) * 2        # weight tiles (bf16, double-buffered)
        + 2 * (tm * tn) * out_bytes  # output tiles
        + 2 * (1 * tn) * 4         # bias tiles
        + tm * tn * 4              # f32 accumulator scratch
    )
    vmem_limit = int(min(48 << 20, max(2 * vmem_need, 16 << 20)))
    cparams = pltpu.CompilerParams(
        dimension_semantics=("parallel", "parallel", "arbitrary")
        if gk > 1
        else ("parallel", "parallel"),
        vmem_limit_bytes=vmem_limit,
    )

    if gk == 1:
        # Fast path: no accumulator scratch, no init/finalize branches.
        y_p = pl.pallas_call(
            _matmul_bias_kernel_single_k,
            out_shape=jax.ShapeDtypeStruct((Mp, Np), odt),
            grid_spec=pltpu.PrefetchScalarGridSpec(
                num_scalar_prefetch=0,
                grid=(gm, gn),
                in_specs=[
                    pl.BlockSpec((tm, tk), lambda i, j: (i, 0)),
                    pl.BlockSpec((tk, tn), lambda i, j: (0, j)),
                    pl.BlockSpec((1, tn), lambda i, j: (0, j)),
                ],
                out_specs=pl.BlockSpec((tm, tn), lambda i, j: (i, j)),
            ),
            compiler_params=cparams,
        )(x_p, wT_p, b_p)
    else:
        y_p = pl.pallas_call(
            _matmul_bias_kernel,
            out_shape=jax.ShapeDtypeStruct((Mp, Np), odt),
            grid_spec=pltpu.PrefetchScalarGridSpec(
                num_scalar_prefetch=0,
                grid=(gm, gn, gk),
                in_specs=[
                    pl.BlockSpec((tm, tk), lambda i, j, k: (i, k)),
                    pl.BlockSpec((tk, tn), lambda i, j, k: (k, j)),
                    pl.BlockSpec((1, tn), lambda i, j, k: (0, j)),
                ],
                out_specs=pl.BlockSpec((tm, tn), lambda i, j, k: (i, j)),
                scratch_shapes=[pltpu.VMEM((tm, tn), jnp.float32)],
            ),
            compiler_params=cparams,
        )(x_p, wT_p, b_p)

    return y_p[:B, :n_out]


def sparse_linear(x, weight, bias, *, out_dtype=None):
    """One-shot convenience wrapper (prep + apply). Prefer prepare + apply for
    repeated inference so the weight transpose/pad/cast is amortized."""
    wT_p, b_p, n_out, tn, tk = prepare_sparse_linear(weight, bias)
    return sparse_linear_apply(
        x, wT_p, b_p, n_out=n_out, tn=tn, tk=tk, out_dtype=out_dtype
    )


# -----------------------------------------------------------------------------
# Parameter construction mirroring SparseLinear.__init__ (mask applied once).
# -----------------------------------------------------------------------------
def truncated_normal_init(key, shape, mean=0.0, std=0.1):
    t = jax.random.truncated_normal(key, -2.0, 2.0, shape, dtype=jnp.float32)
    return t * std + mean


def make_sparse_linear_params(key, in_dim, out_dim, m):
    """m: (in_dim, out_dim) 0/1 connectivity. Weight (j, i) kept iff m[i, j]==1."""
    kw, kb = jax.random.split(key)
    weight = truncated_normal_init(kw, (out_dim, in_dim), mean=0.0, std=0.1)
    keep = m.T.astype(jnp.float32)  # (out_dim, in_dim), 1 = keep
    weight = weight * keep          # weight[mask] = 0
    bound = 1.0 / math.sqrt(in_dim)
    bias = jax.random.uniform(
        kb, (out_dim,), minval=-bound, maxval=bound, dtype=jnp.float32
    )
    return weight, bias


def sparse_linear_ref(x, weight, bias):
    return x @ weight.T + bias[None, :]


if __name__ == "__main__":
    key = jax.random.PRNGKey(0)
    k_m, k_params, k_x = jax.random.split(key, 3)

    batch, in_dim, out_dim = 8, 32, 16

    # Deterministic 0/1 connectivity matrix m: (in_dim, out_dim)
    m = (jax.random.uniform(k_m, (in_dim, out_dim)) > 0.5).astype(jnp.int32)

    weight, bias = make_sparse_linear_params(k_params, in_dim, out_dim, m)
    x = jax.random.normal(k_x, (batch, in_dim), dtype=jnp.float32)

    # Hoisted weight prep (done once), hot path only pads/casts x.
    wT_p, b_p, n_out, tn, tk = prepare_sparse_linear(weight, bias)
    wT_p, b_p = jax.block_until_ready((wT_p, b_p))

    y = sparse_linear_apply(x, wT_p, b_p, n_out=n_out, tn=tn, tk=tk)
    y = jax.block_until_ready(y)

    y_ref = sparse_linear_ref(x, weight, bias)
    assert y.shape == (batch, out_dim)
    # bf16 MXU inputs + f32 accumulation -> loosened tolerance vs f32 reference.
    assert jnp.allclose(y, y_ref, atol=2e-2, rtol=2e-2), "mismatch vs reference"

    print("KERNEL_OK")
</pallas_src>

<mosaic_0001>
module attributes {stable_mosaic.version = 11 : i64} {
  func.func @_matmul_bias_kernel_single_k(%arg0: i32, %arg1: i32, %arg2: memref<16x128xbf16, #tpu.memory_space<vmem>>, %arg3: memref<128x128xbf16, #tpu.memory_space<vmem>>, %arg4: memref<1x128xf32, #tpu.memory_space<vmem>>, %arg5: memref<16x128xf32, #tpu.memory_space<vmem>>) attributes {dimension_semantics = [#tpu.dimension_semantics<parallel>, #tpu.dimension_semantics<parallel>], iteration_bounds = array<i64: 1, 1>, scalar_prefetch = 0 : i64, scratch_operands = 0 : i64, tpu.core_type = #tpu.core_type<tc>, window_params = [{transform_indices = @transform_0, window_bounds = array<i64: 16, 128>}, {transform_indices = @transform_1, window_bounds = array<i64: 128, 128>}, {transform_indices = @transform_2, window_bounds = array<i64: 1, 128>}, {transform_indices = @transform_3, window_bounds = array<i64: 16, 128>}]} {
    %c0 = arith.constant 0 : index
    %c0_0 = arith.constant 0 : index
    %0 = vector.load %arg2[%c0, %c0_0] : memref<16x128xbf16, #tpu.memory_space<vmem>>, vector<16x128xbf16>
    %c0_1 = arith.constant 0 : index
    %c0_2 = arith.constant 0 : index
    %1 = vector.load %arg3[%c0_1, %c0_2] : memref<128x128xbf16, #tpu.memory_space<vmem>>, vector<128x128xbf16>
    %cst = arith.constant dense<0.000000e+00> : vector<16x128xf32>
    %2 = tpu.matmul %0, %1, %cst {dimension_numbers = #tpu.dot_dimension_numbers<[1], [0], [0], [1], [0, 0, 1, 1], [], []>} : vector<16x128xbf16>, vector<128x128xbf16>, vector<16x128xf32> -> vector<16x128xf32>
    %c0_3 = arith.constant 0 : index
    %c0_4 = arith.constant 0 : index
    %3 = vector.load %arg4[%c0_3, %c0_4] : memref<1x128xf32, #tpu.memory_space<vmem>>, vector<1x128xf32>
    %4 = vector.broadcast %3 : vector<1x128xf32> to vector<16x128xf32>
    %5 = arith.addf %2, %4 : vector<16x128xf32>
    %c0_5 = arith.constant 0 : index
    %c0_6 = arith.constant 0 : index
    %6 = vector.load %arg5[%c0_5, %c0_6] : memref<16x128xf32, #tpu.memory_space<vmem>>, vector<16x128xf32>
    tpu.vector_store %arg5[%c0_5, %c0_6], %5 {strides = array<i32>} : memref<16x128xf32, #tpu.memory_space<vmem>>, vector<16x128xf32>,
    return
  }
  func.func @transform_0(%arg0: i32, %arg1: i32) -> (i32, i32) {
    %c0_i32 = arith.constant 0 : i32
    %c0_i32_0 = arith.constant 0 : i32
    return %arg0, %c0_i32 : i32, i32
  }
  func.func @transform_1(%arg0: i32, %arg1: i32) -> (i32, i32) {
    %c0_i32 = arith.constant 0 : i32
    %c0_i32_0 = arith.constant 0 : i32
    return %c0_i32, %arg1 : i32, i32
  }
  func.func @transform_2(%arg0: i32, %arg1: i32) -> (i32, i32) {
    %c0_i32 = arith.constant 0 : i32
    %c0_i32_0 = arith.constant 0 : i32
    return %c0_i32, %arg1 : i32, i32
  }
  func.func @transform_3(%arg0: i32, %arg1: i32) -> (i32, i32) {
    %c0_i32 = arith.constant 0 : i32
    return %arg0, %arg1 : i32, i32
  }
}

</mosaic_0001>

<llo_original>
// kernel: sparse_linear_apply.1
$region0: #{sparse_linear_apply.1}
  #allocation0 [shape = 'u32[]', space=smem, size = 0x4, offset = 0x4, fixed_abs, tag = 'smem constant byte address 0x4 - core index']
  #allocation1 [shape = 'u32[144,128]{1,0:T(1,128)}', space=vmem, size = 0x12000, scoped, tag = 'internal scratch']
  %s0 = inlined_call_operand.vmem [shape: bf16[16,128], index: 0, kind: input, shape index: {}]
  %s1 = inlined_call_operand.hbm [shape: bf16[128,128], index: 1, kind: input, shape index: {}]
  %s2 = inlined_call_operand.vmem [shape: f32[1,128], index: 2, kind: input, shape index: {}]
  %s3 = inlined_call_operand.vmem [shape: f32[16,128], index: 3, kind: output, shape index: {}]
  %s4 = sld [smem:[#allocation0]]
  $region26: #{sparse_linear_apply.1} parent=0
    _
  %s6 = ssub.s32 1, %s4
  %s7 = scalar_select 0, %s6, %s4
  $region1: #{sparse_linear_apply.1} parent=0
    #allocation2 [shape = 'u8[32768]{0}', space=vmem, size = 0x8000, scoped, tag = 'input window, operand 1, single buffered']
    #allocation3 [shape = 's32[1]{0}', space=sflag, size = 0x4, scoped, tag = 'scoped memory for sparse_linear_apply.1']
    %8 = vsyncpa [#allocation3], 0
    // Predicated region
    $region2: #{sparse_linear_apply.1} parent=1 // pred_check
      _
    $region3: #{sparse_linear_apply.1} parent=1 // pred_check_branch
      %10 = sbr.rel (0) target = $region5
    $region4: #{sparse_linear_apply.1} parent=1 // pred_region
      _
    $region5: #{sparse_linear_apply.1} parent=1 // pred_fallthru
      _
    // Predicated region
    $region6: #{sparse_linear_apply.1} parent=1 // pred_check
      _
    $region7: #{sparse_linear_apply.1} parent=1 // pred_check_branch
      %12 = sbr.rel (0) target = $region9
    $region8: #{sparse_linear_apply.1} parent=1 // pred_region
      %s14 = ssub.s32 1024, 1024
      %15 = vsyncadd [#allocation3], %s14
      %s16 = sshll.u32 [#allocation2], 4
      %s17 = int_to_ptr.vmem [resolvable:$true] %s16
      %22 = dma.hbm_to_vmem [thread:$0]  %s1, 1024, %s17, [#allocation3], 64, 64, 4
    $region9: #{sparse_linear_apply.1} parent=1 // pred_fallthru
      _
    // Predicated region
    $region10: #{sparse_linear_apply.1} parent=1 // pred_check
      _
    $region11: #{sparse_linear_apply.1} parent=1 // pred_check_branch
      %24 = sbr.rel (0) target = $region13
    $region12: #{sparse_linear_apply.1} parent=1 // pred_region
      _
    $region13: #{sparse_linear_apply.1} parent=1 // pred_fallthru
      _
    // Predicated region
    $region14: #{sparse_linear_apply.1} parent=1 // pred_check
      _
    $region15: #{sparse_linear_apply.1} parent=1 // pred_check_branch
      %26 = sbr.rel (0) target = $region17
    $region16: #{sparse_linear_apply.1} parent=1 // pred_region
      %27 = dma.done [#allocation3], 1024
    $region17: #{sparse_linear_apply.1} parent=1 // pred_fallthru
      _
    %v29 = vld [vmem:[%s0] sm:$0xf]
    %v30 = vld [vmem:[%s0 + $0x4] sm:$0xf]
    %v31 = vld [vmem:[#allocation2] sm:$0xf]
    %v32 = vld [vmem:[#allocation2 + $0x4] sm:$0xf]
    %v33 = vld [vmem:[#allocation2 + $0x8] sm:$0xf]
    %v34 = vld [vmem:[#allocation2 + $0xc] sm:$0xf]
    %v35 = vld [vmem:[#allocation2 + $0x10] sm:$0xf]
    %v36 = vld [vmem:[#allocation2 + $0x14] sm:$0xf]
    %v37 = vld [vmem:[#allocation2 + $0x18] sm:$0xf]
    %v38 = vld [vmem:[#allocation2 + $0x1c] sm:$0xf]
    %v39 = vld [vmem:[#allocation2 + $0x20] sm:$0xf]
    %v40 = vld [vmem:[#allocation2 + $0x24] sm:$0xf]
    %v41 = vld [vmem:[#allocation2 + $0x28] sm:$0xf]
    %v42 = vld [vmem:[#allocation2 + $0x2c] sm:$0xf]
    %v43 = vld [vmem:[#allocation2 + $0x30] sm:$0xf]
    %v44 = vld [vmem:[#allocation2 + $0x34] sm:$0xf]
    %v45 = vld [vmem:[#allocation2 + $0x38] sm:$0xf]
    %v46 = vld [vmem:[#allocation2 + $0x3c] sm:$0xf]
    %v47 = vld [vmem:[%s2] sm:$0x1]
    %v49 = vlaneseq
    %v50 = vshrl.u32 %v49, 7
    %v51 = vsub.s32 0, %v50
    %v52 = vrot.slane %v47, %v51
    %v56 = vunpack.c.l.b16 %v29
    %v57 = vunpack.c.l.b16 %v30
    %v58 = vpack.c.b16 %v57, %v56
    %v76 = vunpack.c.l.b16 %v31
    %v77 = vunpack.c.l.b16 %v32
    %v78 = vunpack.c.l.b16 %v33
    %v79 = vunpack.c.l.b16 %v34
    %v80 = vunpack.c.l.b16 %v35
    %v81 = vunpack.c.l.b16 %v36
    %v82 = vunpack.c.l.b16 %v37
    %v83 = vunpack.c.l.b16 %v38
    %v84 = vunpack.c.l.b16 %v39
    %v85 = vunpack.c.l.b16 %v40
    %v86 = vunpack.c.l.b16 %v41
    %v87 = vunpack.c.l.b16 %v42
    %v88 = vunpack.c.l.b16 %v43
    %v89 = vunpack.c.l.b16 %v44
    %v90 = vunpack.c.l.b16 %v45
    %v91 = vunpack.c.l.b16 %v46
    %v92 = vpack.c.b16 %v77, %v76
    %v93 = vpack.c.b16 %v79, %v78
    %v94 = vpack.c.b16 %v81, %v80
    %v95 = vpack.c.b16 %v83, %v82
    %v96 = vpack.c.b16 %v85, %v84
    %v97 = vpack.c.b16 %v87, %v86
    %v98 = vpack.c.b16 %v89, %v88
    %v99 = vpack.c.b16 %v91, %v90
    %108 = vmatprep.subr.bf16.mxu0 0
    %109 = vmatpush1.bf16.msra.mxu0 %v99
    %110 = vmatprep.subr.bf16.mxu0 0
    %111 = vmatpush1.bf16.msra.mxu0 %v98
    %112 = vmatprep.subr.bf16.mxu0 0
    %113 = vmatpush1.bf16.msra.mxu0 %v97
    %114 = vmatprep.subr.bf16.mxu0 0
    %115 = vmatpush1.bf16.msra.mxu0 %v96
    %116 = vmatprep.subr.bf16.mxu0 0
    %117 = vmatpush1.bf16.msra.mxu0 %v95
    %118 = vmatprep.subr.bf16.mxu0 0
    %119 = vmatpush1.bf16.msra.mxu0 %v94
    %120 = vmatprep.subr.bf16.mxu0 0
    %121 = vmatpush1.bf16.msra.mxu0 %v93
    %122 = vmatprep.subr.bf16.mxu0 0
    %123 = vmatpush1.bf16.msra.mxu0 %v92
    %124 = vmatprep.subr.bf16.mxu0 0
    %125 = vmatpush2.bf16.msra.mxu0 0
    %126 = vmatprep.subr.bf16.mxu0 0
    %127 = vmatpush2.bf16.msra.mxu0 0
    %128 = vmatprep.subr.bf16.mxu0 0
    %129 = vmatpush2.bf16.msra.mxu0 0
    %130 = vmatprep.subr.bf16.mxu0 0
    %131 = vmatpush2.bf16.msra.mxu0 0
    %132 = vmatprep.subr.bf16.mxu0 0
    %133 = vmatpush2.bf16.msra.mxu0 0
    %134 = vmatprep.subr.bf16.mxu0 0
    %135 = vmatpush2.bf16.msra.mxu0 0
    %136 = vmatprep.subr.bf16.mxu0 0
    %137 = vmatpush2.bf16.msra.mxu0 0
    %138 = vmatprep.subr.bf16.mxu0 0
    %139 = vmatpush2.bf16.msra.mxu0 0
    %140 = vmatprep.mubr.bf16.mxu0 0
    %141 = vmatmul.mubr.bf16.gmra.mxu0 %v58
    %v142 = vpop.f32.mrf.mxu0
    %v143 = vadd.f32 %v52, %v142
    %v144 = vpop.f32.mrf.mxu0
    %v145 = vpop.f32.mrf.mxu0
    %v146 = vadd.f32 %v52, %v145
    %v147 = vpop.f32.mrf.mxu0
    %148 = vdwg.mxu0
    %149 = vst [vmem:[%s3] sm:$0xff] %v143
    %150 = vst [vmem:[%s3 + $0x8] sm:$0xff] %v146
    // Predicated region
    $region18: #{sparse_linear_apply.1} parent=1 // pred_check
      _
    $region19: #{sparse_linear_apply.1} parent=1 // pred_check_branch
      %152 = sbr.rel (0) target = $region21
    $region20: #{sparse_linear_apply.1} parent=1 // pred_region
      _
    $region21: #{sparse_linear_apply.1} parent=1 // pred_fallthru
      _
    // Predicated region
    $region22: #{sparse_linear_apply.1} parent=1 // pred_check
      _
    $region23: #{sparse_linear_apply.1} parent=1 // pred_check_branch
      %154 = sbr.rel (0) target = $region25
    $region24: #{sparse_linear_apply.1} parent=1 // pred_region
      _
    $region25: #{sparse_linear_apply.1} parent=1 // pred_fallthru
      _
    %155 = vsyncpa [#allocation3], 1

</llo_original>
